<compile_context>
chip_gen: v6e
topology: v6e:2x2x1
jax: 0.10.0
libtpu: 0.0.40
codegen_flags: <defaults>
</compile_context>

<pallas_src>
import jax
import jax.numpy as jnp
import numpy as np
from jax.experimental import pallas as pl
from jax.experimental.pallas import tpu as pltpu

LANE = 128      # lane width / minimum last-dim tile
SUBLANE = 8     # f32 sublane tile


def _round_up(x, m):
    return ((x + m - 1) // m) * m


def _tpu_vmem_capacity_bytes():
    """Physical VMEM capacity of the current TPU generation (with fallback)."""
    try:
        return int(pltpu.get_tpu_info().vmem_capacity_bytes)
    except Exception:
        return 64 * 1024 * 1024   # conservative (v7x per-TC size)


# -----------------------------------------------------------------------------
# Kernel: grid = (batch_tiles, vocab_tiles); vocab is the reduction (last) axis.
# -----------------------------------------------------------------------------
def _bow_mlp_kernel(counts_ref, table_ref,
                    w1_ref, b1_ref, w2_ref, b2_ref, w3_ref, b3_ref,
                    wout_ref, bout_ref,
                    logits_ref,
                    acc_ref):
    k = pl.program_id(1)
    nk = pl.num_programs(1)

    @pl.when(k == 0)
    def _init():
        acc_ref[...] = jnp.zeros_like(acc_ref)

    # Bag-of-words mean: normalized counts (bf16) @ table tile (bf16), f32 acc.
    acc_ref[...] += jnp.dot(counts_ref[...], table_ref[...],
                            preferred_element_type=jnp.float32)

    @pl.when(k == nk - 1)
    def _finalize():
        bow = acc_ref[...]                                           # [TB, H] f32
        # fc_hidden / fc_2 / fc_3 with eval-mode BatchNorm folded into W, b.
        h = jnp.maximum(
            jnp.dot(bow, w1_ref[...], preferred_element_type=jnp.float32)
            + b1_ref[...], 0.0)
        h = jnp.maximum(
            jnp.dot(h, w2_ref[...], preferred_element_type=jnp.float32)
            + b2_ref[...], 0.0)
        h = jnp.maximum(
            jnp.dot(h, w3_ref[...], preferred_element_type=jnp.float32)
            + b3_ref[...], 0.0)
        # fc_output padded to LANE columns (column 0 is the real logit) so the
        # store is a full lane-dense tile (no width-1 masked stores).
        logits_ref[...] = (
            jnp.dot(h, wout_ref[...], preferred_element_type=jnp.float32)
            + bout_ref[...])                                         # [TB, LANE]


# -----------------------------------------------------------------------------
# Wrapper
# -----------------------------------------------------------------------------
def bow_forward_pallas(ids, targets, params, *, tb=None, tv=None,
                       min_batch_tiles=1, table_dtype=jnp.bfloat16,
                       vmem_limit_bytes=None):
    """Eval-mode forward of BOW_model.  Returns (loss, logits[B]).

    ids: [B, S] int32, pad positions marked with -1 (variable true lengths).
    targets: [B] float32 in {0, 1}.
    min_batch_tiles: set to 2 on v7x so both TensorCores get a batch tile.
    """
    ids = jnp.asarray(ids, jnp.int32)
    targets = jnp.asarray(targets, jnp.float32)
    B, _ = ids.shape
    V, H = params["embedding"].shape
    eps = params["bn_eps"]

    H_pad = _round_up(H, LANE)

    # ---- batch tile: big enough to feed the MXU, >=min_batch_tiles tiles -----
    if tb is None:
        tb = min(128, _round_up(B, SUBLANE))
    tb = max(SUBLANE, _round_up(tb, SUBLANE))
    if min_batch_tiles > 1:
        tb = min(tb, _round_up(-(-B // min_batch_tiles), SUBLANE))
        tb = max(tb, SUBLANE)
    B_pad = _round_up(B, tb)

    # ---- generation-aware VMEM budget and vocab tile --------------------------
    capacity = _tpu_vmem_capacity_bytes()
    if vmem_limit_bytes is None:
        vmem_limit_bytes = (capacity * 3) // 4      # ~48 MiB v7x, ~96 MiB v5e/v6e
    vmem_limit_bytes = int(min(vmem_limit_bytes, (capacity * 7) // 8))

    itemsize = jnp.dtype(table_dtype).itemsize
    # VMEM not available to the streamed counts/table tiles: resident MLP
    # weights/biases (double-buffered), the logits output block, the f32
    # accumulator scratch, plus ~2 MiB slack for compiler internals.
    fixed = (2 * 4 * (3 * H_pad * H_pad + 3 * H_pad + H_pad * LANE + LANE)
             + 2 * 4 * tb * LANE
             + 4 * tb * H_pad
             + (2 << 20))
    avail = max(vmem_limit_bytes - fixed, 2 * itemsize * (tb + H_pad) * LANE)
    if tv is None:
        # counts tile (tb x tv) AND table tile (tv x H_pad), each double-buffered.
        tv = avail // (2 * itemsize * (tb + H_pad))
        tv = max(LANE, min(16384, (tv // LANE) * LANE))
    tv = _round_up(tv, LANE)
    tv = min(tv, _round_up(V, LANE))
    V_pad = _round_up(V, tv)

    # ---- wrapper-side glue: counts via scatter-add, BN folding, padding ------
    valid = ids >= 0
    lengths = jnp.maximum(valid.sum(axis=1), 1).astype(jnp.float32)
    safe_ids = jnp.where(valid, ids, 0)
    counts = jnp.zeros((B, V_pad), jnp.float32)
    counts = counts.at[jnp.arange(B)[:, None], safe_ids].add(
        valid.astype(jnp.float32))
    counts = counts / lengths[:, None]                              # [B, V_pad]
    counts_pad = jnp.zeros((B_pad, V_pad), table_dtype)
    counts_pad = counts_pad.at[:B].set(counts.astype(table_dtype))

    table_pad = jnp.zeros((V_pad, H_pad), table_dtype)
    table_pad = table_pad.at[:V, :H].set(
        params["embedding"].astype(table_dtype))

    def fold(w, b, bn):
        gamma, beta, mean, var = bn
        scale = gamma / jnp.sqrt(var + eps)                   # f32 BN folding
        shift = beta - mean * scale
        w_eff = w.T.astype(jnp.float32) * scale[None, :]      # [in, out]
        b_eff = b.astype(jnp.float32) * scale + shift
        wp = jnp.zeros((H_pad, H_pad), jnp.float32).at[:H, :H].set(w_eff)
        bp = jnp.zeros((1, H_pad), jnp.float32).at[0, :H].set(b_eff)
        return wp, bp

    w1p, b1p = fold(params["w1"], params["b1"], params["bn1"])
    w2p, b2p = fold(params["w2"], params["b2"], params["bn2"])
    w3p, b3p = fold(params["w3"], params["b3"], params["bn3"])

    woutp = jnp.zeros((H_pad, LANE), jnp.float32)
    woutp = woutp.at[:H, 0].set(params["w_out"][0].astype(jnp.float32))
    boutp = jnp.zeros((1, LANE), jnp.float32).at[0, 0].set(
        params["b_out"][0].astype(jnp.float32))

    # ---- pallas_call ----------------------------------------------------------
    grid = (B_pad // tb, V_pad // tv)
    resident = lambda i, k: (0, 0)          # constant block -> never re-DMA'd
    in_specs = [
        pl.BlockSpec((tb, tv), lambda i, k: (i, k)),           # counts (bf16)
        pl.BlockSpec((tv, H_pad), lambda i, k: (k, 0)),        # table  (bf16)
        pl.BlockSpec((H_pad, H_pad), resident),                # w1 (folded, f32)
        pl.BlockSpec((1, H_pad), resident),                    # b1
        pl.BlockSpec((H_pad, H_pad), resident),                # w2
        pl.BlockSpec((1, H_pad), resident),                    # b2
        pl.BlockSpec((H_pad, H_pad), resident),                # w3
        pl.BlockSpec((1, H_pad), resident),                    # b3
        pl.BlockSpec((H_pad, LANE), resident),                 # w_out (padded)
        pl.BlockSpec((1, LANE), resident),                     # b_out (padded)
    ]
    out_specs = pl.BlockSpec((tb, LANE), lambda i, k: (i, 0))  # logits (lane-dense)
    out_shape = jax.ShapeDtypeStruct((B_pad, LANE), jnp.float32)

    kernel = pl.pallas_call(
        _bow_mlp_kernel,
        out_shape=out_shape,
        grid_spec=pltpu.PrefetchScalarGridSpec(
            num_scalar_prefetch=0,
            grid=grid,
            in_specs=in_specs,
            out_specs=out_specs,
            scratch_shapes=[pltpu.VMEM((tb, H_pad), jnp.float32)]),
        compiler_params=pltpu.CompilerParams(
            dimension_semantics=("parallel", "arbitrary"),
            vmem_limit_bytes=vmem_limit_bytes),
    )
    logits_pad = kernel(counts_pad, table_pad,
                        w1p, b1p, w2p, b2p, w3p, b3p, woutp, boutp)

    logits = logits_pad[:B, 0]
    # Numerically stable BCE-with-logits on B scalars (cheaper than an in-kernel
    # [B_pad, 128] loss writeback).
    per_ex = (jnp.maximum(logits, 0.0) - logits * targets
              + jnp.log1p(jnp.exp(-jnp.abs(logits))))
    loss = jnp.mean(per_ex)
    return loss, logits


# -----------------------------------------------------------------------------
# Pure-JAX reference (PyTorch eval-mode semantics)
# -----------------------------------------------------------------------------
def bow_forward_reference(ids, targets, params):
    emb = params["embedding"]
    eps = params["bn_eps"]
    valid = ids >= 0
    lengths = jnp.maximum(valid.sum(axis=1), 1).astype(jnp.float32)
    safe_ids = jnp.where(valid, ids, 0)
    e = emb[safe_ids] * valid[..., None].astype(emb.dtype)
    bow = e.sum(axis=1) / lengths[:, None]

    def layer(x, w, b, bn):
        gamma, beta, mean, var = bn
        y = x @ w.T + b
        y = (y - mean) / jnp.sqrt(var + eps) * gamma + beta
        return jnp.maximum(y, 0.0)

    h = layer(bow, params["w1"], params["b1"], params["bn1"])
    h = layer(h, params["w2"], params["b2"], params["bn2"])
    h = layer(h, params["w3"], params["b3"], params["bn3"])
    z = (h @ params["w_out"].T + params["b_out"])[:, 0]
    per_ex = (jnp.maximum(z, 0.0) - z * targets
              + jnp.log1p(jnp.exp(-jnp.abs(z))))
    return per_ex.mean(), z


def _make_params(key, V, H):
    ks = jax.random.split(key, 12)

    def n(k, shape, scale=1.0):
        return scale * jax.random.normal(k, shape, dtype=jnp.float32)

    def bn(k):
        k1, k2, k3, k4 = jax.random.split(k, 4)
        gamma = jax.random.uniform(k1, (H,), minval=0.5, maxval=1.5)
        beta = 0.1 * jax.random.normal(k2, (H,))
        mean = 0.1 * jax.random.normal(k3, (H,))
        var = jax.random.uniform(k4, (H,), minval=0.5, maxval=1.5)
        return (gamma, beta, mean, var)

    s = 1.0 / float(np.sqrt(H))
    return {
        "embedding": n(ks[0], (V, H)),
        "w1": n(ks[1], (H, H), s), "b1": n(ks[2], (H,), 0.1),
        "w2": n(ks[3], (H, H), s), "b2": n(ks[4], (H,), 0.1),
        "w3": n(ks[5], (H, H), s), "b3": n(ks[6], (H,), 0.1),
        "w_out": n(ks[7], (1, H), 2.0 * s), "b_out": n(ks[8], (1,), 0.1),
        "bn1": bn(ks[9]), "bn2": bn(ks[10]), "bn3": bn(ks[11]),
        "bn_eps": 1e-5,
    }


if __name__ == "__main__":
    key = jax.random.PRNGKey(0)
    B, S, V, H = 12, 20, 1000, 100     # small, intentionally non-128-aligned H
    k_par, k_len, k_ids, k_t = jax.random.split(key, 4)

    params = _make_params(k_par, V, H)

    seq_lens = jax.random.randint(k_len, (B,), 5, S + 1)
    ids_full = jax.random.randint(k_ids, (B, S), 0, V)
    pos = jnp.arange(S)[None, :]
    ids = jnp.where(pos < seq_lens[:, None], ids_full, -1)    # -1 == pad
    targets = jax.random.bernoulli(k_t, 0.5, (B,)).astype(jnp.float32)

    ref_loss, ref_logits = bow_forward_reference(ids, targets, params)
    ref_loss, ref_logits = jax.block_until_ready((ref_loss, ref_logits))

    # Config 1: explicit small vocab tile -> multi-step K reduction, 2 batch
    # tiles (exercises the "parallel" batch axis / v7x megacore path).
    loss1, logits1 = bow_forward_pallas(ids, targets, params,
                                        tv=256, min_batch_tiles=2)
    # Config 2: fully auto-derived tiles (generation-aware VMEM budget).
    loss2, logits2 = bow_forward_pallas(ids, targets, params)
    (loss1, logits1, loss2, logits2) = jax.block_until_ready(
        (loss1, logits1, loss2, logits2))

    for loss, logits in ((loss1, logits1), (loss2, logits2)):
        assert logits.shape == (B,)
        assert np.all(np.isfinite(np.asarray(logits))) and np.isfinite(float(loss))
        np.testing.assert_allclose(np.asarray(logits), np.asarray(ref_logits),
                                   rtol=5e-2, atol=5e-2)
        np.testing.assert_allclose(float(loss), float(ref_loss),
                                   rtol=5e-2, atol=5e-2)
    print("KERNEL_OK")
</pallas_src>

<mosaic_0001>
module attributes {stable_mosaic.version = 11 : i64} {
  func.func @_bow_mlp_kernel(%arg0: i32, %arg1: i32, %arg2: memref<8x256xbf16, #tpu.memory_space<vmem>>, %arg3: memref<256x128xbf16, #tpu.memory_space<vmem>>, %arg4: memref<128x128xf32, #tpu.memory_space<vmem>>, %arg5: memref<1x128xf32, #tpu.memory_space<vmem>>, %arg6: memref<128x128xf32, #tpu.memory_space<vmem>>, %arg7: memref<1x128xf32, #tpu.memory_space<vmem>>, %arg8: memref<128x128xf32, #tpu.memory_space<vmem>>, %arg9: memref<1x128xf32, #tpu.memory_space<vmem>>, %arg10: memref<128x128xf32, #tpu.memory_space<vmem>>, %arg11: memref<1x128xf32, #tpu.memory_space<vmem>>, %arg12: memref<8x128xf32, #tpu.memory_space<vmem>>, %arg13: memref<8x128xf32, #tpu.memory_space<vmem>>) attributes {dimension_semantics = [#tpu.dimension_semantics<parallel>, #tpu.dimension_semantics<arbitrary>], iteration_bounds = array<i64: 2, 4>, scalar_prefetch = 0 : i64, scratch_operands = 1 : i64, tpu.core_type = #tpu.core_type<tc>, window_params = [{transform_indices = @transform_0, window_bounds = array<i64: 8, 256>}, {transform_indices = @transform_1, window_bounds = array<i64: 256, 128>}, {pipeline_mode = #tpu.pipeline_mode<synchronous>, transform_indices = @transform_2, window_bounds = array<i64: 128, 128>}, {pipeline_mode = #tpu.pipeline_mode<synchronous>, transform_indices = @transform_3, window_bounds = array<i64: 1, 128>}, {pipeline_mode = #tpu.pipeline_mode<synchronous>, transform_indices = @transform_4, window_bounds = array<i64: 128, 128>}, {pipeline_mode = #tpu.pipeline_mode<synchronous>, transform_indices = @transform_5, window_bounds = array<i64: 1, 128>}, {pipeline_mode = #tpu.pipeline_mode<synchronous>, transform_indices = @transform_6, window_bounds = array<i64: 128, 128>}, {pipeline_mode = #tpu.pipeline_mode<synchronous>, transform_indices = @transform_7, window_bounds = array<i64: 1, 128>}, {pipeline_mode = #tpu.pipeline_mode<synchronous>, transform_indices = @transform_8, window_bounds = array<i64: 128, 128>}, {pipeline_mode = #tpu.pipeline_mode<synchronous>, transform_indices = @transform_9, window_bounds = array<i64: 1, 128>}, {transform_indices = @transform_10, window_bounds = array<i64: 8, 128>}]} {
    %c0_i32 = arith.constant 0 : i32
    %0 = arith.cmpi eq, %arg1, %c0_i32 : i32
    %1 = arith.extui %0 : i1 to i32
    %c0_i32_0 = arith.constant 0 : i32
    %2 = arith.cmpi ne, %1, %c0_i32_0 : i32
    scf.if %2 {
      %cst_9 = arith.constant 0.000000e+00 : f32
      %12 = vector.broadcast %cst_9 : f32 to vector<8x128xf32>
      %c0_10 = arith.constant 0 : index
      %c0_11 = arith.constant 0 : index
      %13 = vector.load %arg13[%c0_10, %c0_11] : memref<8x128xf32, #tpu.memory_space<vmem>>, vector<8x128xf32>
      tpu.vector_store %arg13[%c0_10, %c0_11], %12 {strides = array<i32>} : memref<8x128xf32, #tpu.memory_space<vmem>>, vector<8x128xf32>,
    } else {
    }
    %c0 = arith.constant 0 : index
    %c0_1 = arith.constant 0 : index
    %3 = vector.load %arg13[%c0, %c0_1] : memref<8x128xf32, #tpu.memory_space<vmem>>, vector<8x128xf32>
    %c0_2 = arith.constant 0 : index
    %c0_3 = arith.constant 0 : index
    %4 = vector.load %arg2[%c0_2, %c0_3] : memref<8x256xbf16, #tpu.memory_space<vmem>>, vector<8x256xbf16>
    %c0_4 = arith.constant 0 : index
    %c0_5 = arith.constant 0 : index
    %5 = vector.load %arg3[%c0_4, %c0_5] : memref<256x128xbf16, #tpu.memory_space<vmem>>, vector<256x128xbf16>
    %cst = arith.constant dense<0.000000e+00> : vector<8x128xf32>
    %6 = tpu.matmul %4, %5, %cst {dimension_numbers = #tpu.dot_dimension_numbers<[1], [0], [0], [1], [0, 0, 1, 1], [], []>} : vector<8x256xbf16>, vector<256x128xbf16>, vector<8x128xf32> -> vector<8x128xf32>
    %7 = arith.addf %3, %6 : vector<8x128xf32>
    %c0_6 = arith.constant 0 : index
    %c0_7 = arith.constant 0 : index
    %8 = vector.load %arg13[%c0_6, %c0_7] : memref<8x128xf32, #tpu.memory_space<vmem>>, vector<8x128xf32>
    tpu.vector_store %arg13[%c0_6, %c0_7], %7 {strides = array<i32>} : memref<8x128xf32, #tpu.memory_space<vmem>>, vector<8x128xf32>,
    %c3_i32 = arith.constant 3 : i32
    %9 = arith.cmpi eq, %arg1, %c3_i32 : i32
    %10 = arith.extui %9 : i1 to i32
    %c0_i32_8 = arith.constant 0 : i32
    %11 = arith.cmpi ne, %10, %c0_i32_8 : i32
    scf.if %11 {
      %c0_9 = arith.constant 0 : index
      %c0_10 = arith.constant 0 : index
      %12 = vector.load %arg13[%c0_9, %c0_10] : memref<8x128xf32, #tpu.memory_space<vmem>>, vector<8x128xf32>
      %c0_11 = arith.constant 0 : index
      %c0_12 = arith.constant 0 : index
      %13 = vector.load %arg4[%c0_11, %c0_12] : memref<128x128xf32, #tpu.memory_space<vmem>>, vector<128x128xf32>
      %cst_13 = arith.constant dense<0.000000e+00> : vector<8x128xf32>
      %14 = tpu.matmul %12, %13, %cst_13 {dimension_numbers = #tpu.dot_dimension_numbers<[1], [0], [0], [1], [0, 0, 1, 1], [], []>} : vector<8x128xf32>, vector<128x128xf32>, vector<8x128xf32> -> vector<8x128xf32>
      %c0_14 = arith.constant 0 : index
      %c0_15 = arith.constant 0 : index
      %15 = vector.load %arg5[%c0_14, %c0_15] : memref<1x128xf32, #tpu.memory_space<vmem>>, vector<1x128xf32>
      %16 = vector.broadcast %15 : vector<1x128xf32> to vector<8x128xf32>
      %17 = arith.addf %14, %16 : vector<8x128xf32>
      %cst_16 = arith.constant 0.000000e+00 : f32
      %18 = vector.broadcast %cst_16 : f32 to vector<8x128xf32>
      %19 = arith.maximumf %17, %18 : vector<8x128xf32>
      %c0_17 = arith.constant 0 : index
      %c0_18 = arith.constant 0 : index
      %20 = vector.load %arg6[%c0_17, %c0_18] : memref<128x128xf32, #tpu.memory_space<vmem>>, vector<128x128xf32>
      %cst_19 = arith.constant dense<0.000000e+00> : vector<8x128xf32>
      %21 = tpu.matmul %19, %20, %cst_19 {dimension_numbers = #tpu.dot_dimension_numbers<[1], [0], [0], [1], [0, 0, 1, 1], [], []>} : vector<8x128xf32>, vector<128x128xf32>, vector<8x128xf32> -> vector<8x128xf32>
      %c0_20 = arith.constant 0 : index
      %c0_21 = arith.constant 0 : index
      %22 = vector.load %arg7[%c0_20, %c0_21] : memref<1x128xf32, #tpu.memory_space<vmem>>, vector<1x128xf32>
      %23 = vector.broadcast %22 : vector<1x128xf32> to vector<8x128xf32>
      %24 = arith.addf %21, %23 : vector<8x128xf32>
      %cst_22 = arith.constant 0.000000e+00 : f32
      %25 = vector.broadcast %cst_22 : f32 to vector<8x128xf32>
      %26 = arith.maximumf %24, %25 : vector<8x128xf32>
      %c0_23 = arith.constant 0 : index
      %c0_24 = arith.constant 0 : index
      %27 = vector.load %arg8[%c0_23, %c0_24] : memref<128x128xf32, #tpu.memory_space<vmem>>, vector<128x128xf32>
      %cst_25 = arith.constant dense<0.000000e+00> : vector<8x128xf32>
      %28 = tpu.matmul %26, %27, %cst_25 {dimension_numbers = #tpu.dot_dimension_numbers<[1], [0], [0], [1], [0, 0, 1, 1], [], []>} : vector<8x128xf32>, vector<128x128xf32>, vector<8x128xf32> -> vector<8x128xf32>
      %c0_26 = arith.constant 0 : index
      %c0_27 = arith.constant 0 : index
      %29 = vector.load %arg9[%c0_26, %c0_27] : memref<1x128xf32, #tpu.memory_space<vmem>>, vector<1x128xf32>
      %30 = vector.broadcast %29 : vector<1x128xf32> to vector<8x128xf32>
      %31 = arith.addf %28, %30 : vector<8x128xf32>
      %cst_28 = arith.constant 0.000000e+00 : f32
      %32 = vector.broadcast %cst_28 : f32 to vector<8x128xf32>
      %33 = arith.maximumf %31, %32 : vector<8x128xf32>
      %c0_29 = arith.constant 0 : index
      %c0_30 = arith.constant 0 : index
      %34 = vector.load %arg10[%c0_29, %c0_30] : memref<128x128xf32, #tpu.memory_space<vmem>>, vector<128x128xf32>
      %cst_31 = arith.constant dense<0.000000e+00> : vector<8x128xf32>
      %35 = tpu.matmul %33, %34, %cst_31 {dimension_numbers = #tpu.dot_dimension_numbers<[1], [0], [0], [1], [0, 0, 1, 1], [], []>} : vector<8x128xf32>, vector<128x128xf32>, vector<8x128xf32> -> vector<8x128xf32>
      %c0_32 = arith.constant 0 : index
      %c0_33 = arith.constant 0 : index
      %36 = vector.load %arg11[%c0_32, %c0_33] : memref<1x128xf32, #tpu.memory_space<vmem>>, vector<1x128xf32>
      %37 = vector.broadcast %36 : vector<1x128xf32> to vector<8x128xf32>
      %38 = arith.addf %35, %37 : vector<8x128xf32>
      %c0_34 = arith.constant 0 : index
      %c0_35 = arith.constant 0 : index
      %39 = vector.load %arg12[%c0_34, %c0_35] : memref<8x128xf32, #tpu.memory_space<vmem>>, vector<8x128xf32>
      tpu.vector_store %arg12[%c0_34, %c0_35], %38 {strides = array<i32>} : memref<8x128xf32, #tpu.memory_space<vmem>>, vector<8x128xf32>,
    } else {
    }
    return
  }
  func.func @transform_0(%arg0: i32, %arg1: i32) -> (i32, i32) {
    %c0_i32 = arith.constant 0 : i32
    return %arg0, %arg1 : i32, i32
  }
  func.func @transform_1(%arg0: i32, %arg1: i32) -> (i32, i32) {
    %c0_i32 = arith.constant 0 : i32
    %c0_i32_0 = arith.constant 0 : i32
    return %arg1, %c0_i32 : i32, i32
  }
  func.func @transform_2(%arg0: i32, %arg1: i32) -> (i32, i32) {
    %c0_i32 = arith.constant 0 : i32
    %c0_i32_0 = arith.constant 0 : i32
    %c0_i32_1 = arith.constant 0 : i32
    return %c0_i32, %c0_i32_0 : i32, i32
  }
  func.func @transform_3(%arg0: i32, %arg1: i32) -> (i32, i32) {
    %c0_i32 = arith.constant 0 : i32
    %c0_i32_0 = arith.constant 0 : i32
    %c0_i32_1 = arith.constant 0 : i32
    return %c0_i32, %c0_i32_0 : i32, i32
  }
  func.func @transform_4(%arg0: i32, %arg1: i32) -> (i32, i32) {
    %c0_i32 = arith.constant 0 : i32
    %c0_i32_0 = arith.constant 0 : i32
    %c0_i32_1 = arith.constant 0 : i32
    return %c0_i32, %c0_i32_0 : i32, i32
  }
  func.func @transform_5(%arg0: i32, %arg1: i32) -> (i32, i32) {
    %c0_i32 = arith.constant 0 : i32
    %c0_i32_0 = arith.constant 0 : i32
    %c0_i32_1 = arith.constant 0 : i32
    return %c0_i32, %c0_i32_0 : i32, i32
  }
  func.func @transform_6(%arg0: i32, %arg1: i32) -> (i32, i32) {
    %c0_i32 = arith.constant 0 : i32
    %c0_i32_0 = arith.constant 0 : i32
    %c0_i32_1 = arith.constant 0 : i32
    return %c0_i32, %c0_i32_0 : i32, i32
  }
  func.func @transform_7(%arg0: i32, %arg1: i32) -> (i32, i32) {
    %c0_i32 = arith.constant 0 : i32
    %c0_i32_0 = arith.constant 0 : i32
    %c0_i32_1 = arith.constant 0 : i32
    return %c0_i32, %c0_i32_0 : i32, i32
  }
  func.func @transform_8(%arg0: i32, %arg1: i32) -> (i32, i32) {
    %c0_i32 = arith.constant 0 : i32
    %c0_i32_0 = arith.constant 0 : i32
    %c0_i32_1 = arith.constant 0 : i32
    return %c0_i32, %c0_i32_0 : i32, i32
  }
  func.func @transform_9(%arg0: i32, %arg1: i32) -> (i32, i32) {
    %c0_i32 = arith.constant 0 : i32
    %c0_i32_0 = arith.constant 0 : i32
    %c0_i32_1 = arith.constant 0 : i32
    return %c0_i32, %c0_i32_0 : i32, i32
  }
  func.func @transform_10(%arg0: i32, %arg1: i32) -> (i32, i32) {
    %c0_i32 = arith.constant 0 : i32
    %c0_i32_0 = arith.constant 0 : i32
    return %arg0, %c0_i32 : i32, i32
  }
}

</mosaic_0001>

<llo_original>
// kernel: tpu_custom_call.1
$region0: #{tpu_custom_call.1}
  #allocation0 [shape = 'u32[]', space=smem, size = 0x4, offset = 0x4, fixed_abs, tag = 'smem constant byte address 0x4 - core index']
  #allocation1 [shape = 'u32[144,128]{1,0:T(1,128)}', space=vmem, size = 0x12000, scoped, tag = 'internal scratch']
  #allocation2 [shape = 'f32[8,128]{1,0:T(8,128)}', space=vmem, size = 0x1000, scoped, tag = 'scratch operand']
  %s0 = inlined_call_operand.hbm [shape: bf16[16,1024], index: 0, kind: input, shape index: {}]
  %s1 = inlined_call_operand.hbm [shape: bf16[1024,128], index: 1, kind: input, shape index: {}]
  %s2 = inlined_call_operand.hbm [shape: f32[128,128], index: 2, kind: input, shape index: {}]
  %s3 = inlined_call_operand.vmem [shape: f32[1,128], index: 3, kind: input, shape index: {}]
  %s4 = inlined_call_operand.hbm [shape: f32[128,128], index: 4, kind: input, shape index: {}]
  %s5 = inlined_call_operand.vmem [shape: f32[1,128], index: 5, kind: input, shape index: {}]
  %s6 = inlined_call_operand.hbm [shape: f32[128,128], index: 6, kind: input, shape index: {}]
  %s7 = inlined_call_operand.vmem [shape: f32[1,128], index: 7, kind: input, shape index: {}]
  %s8 = inlined_call_operand.hbm [shape: f32[128,128], index: 8, kind: input, shape index: {}]
  %s9 = inlined_call_operand.vmem [shape: f32[1,128], index: 9, kind: input, shape index: {}]
  %s10 = inlined_call_operand.hbm [shape: f32[16,128], index: 10, kind: output, shape index: {}]
  %s11 = sld [smem:[#allocation0]]
  $region105: #{tpu_custom_call.1} parent=0
    _
  %s13 = ssub.s32 1, %s11
  %s14 = scalar_select 0, %s13, %s11
  $region1: #{tpu_custom_call.1} parent=0
    #allocation3 [shape = 'u8[8192]{0}', space=vmem, size = 0x2000, scoped, tag = 'input window, operand 0']
    #allocation4 [shape = 's32[2]{0}', space=sflag, size = 0x8, scoped, tag = 'scoped memory for tpu_custom_call.1']
    #allocation5 [shape = 's32[2]{0}', space=sflag, size = 0x8, scoped, tag = 'scoped memory for tpu_custom_call.1']
    #allocation6 [shape = 'u8[131072]{0}', space=vmem, size = 0x20000, scoped, tag = 'input window, operand 1']
    #allocation7 [shape = 's32[2]{0}', space=sflag, size = 0x8, scoped, tag = 'scoped memory for tpu_custom_call.1']
    #allocation8 [shape = 'u8[65536]{0}', space=vmem, size = 0x10000, scoped, tag = 'input window, operand 2, single buffered']
    #allocation9 [shape = 'u8[65536]{0}', space=vmem, size = 0x10000, scoped, tag = 'input window, operand 4, single buffered']
    #allocation10 [shape = 's32[1]{0}', space=sflag, size = 0x4, scoped, tag = 'scoped memory for tpu_custom_call.1']
    #allocation11 [shape = 'u8[65536]{0}', space=vmem, size = 0x10000, scoped, tag = 'input window, operand 6, single buffered']
    #allocation12 [shape = 'u8[65536]{0}', space=vmem, size = 0x10000, scoped, tag = 'input window, operand 8, single buffered']
    #allocation13 [shape = 's32[1]{0}', space=sflag, size = 0x4, scoped, tag = 'scoped memory for tpu_custom_call.1']
    #allocation14 [shape = 'u8[8192]{0}', space=vmem, size = 0x2000, scoped, tag = 'output window, operand 0']
    %15 = vsyncpa [#allocation4], 0
    %s16 = scalar_lea.sflag [#allocation4], 1
    %17 = vsyncpa %s16, 0
    %18 = vsyncpa [#allocation7], 0
    %s19 = scalar_lea.sflag [#allocation7], 1
    %20 = vsyncpa %s19, 0
    %21 = vsyncpa [#allocation10], 0
    %22 = vsyncpa [#allocation13], 0
    %23 = vsyncpa [#allocation5], 0
    %s24 = scalar_lea.sflag [#allocation5], 1
    %25 = vsyncpa %s24, 0
    loop: start=0, step=1, limit=10
    $region2: #{tpu_custom_call.1} parent=1 // loop_pre_header
      _
    $region3: #{tpu_custom_call.1} parent=1 // loop_header
      %s27 = sphi 0, %s31
      %p28 = scmp.ge.s32.totalorder %s27, 10
      %s34 = sphi 0, %s46
      %s35 = sphi 0, %s42
      %s36 = sphi 0, %s34
      %s37 = sphi 0, %s35
      %s38 = sphi 0, %s36
      %s39 = sphi 0, %s37
      %s51 = sphi 0, %s53
      %s54 = sphi 0, %s51
      %s55 = sphi 0, %s54
      %s71 = sphi 0, %s55
      %s77 = sphi 0, %s79
      %s80 = sphi 0, %s77
      %s81 = sphi 0, %s80
      %s97 = sphi 0, %s81
      %s101 = sphi 0, %s101
      %s103 = sphi 0, %s101
      %s104 = sphi 0, %s103
      %s118 = sphi 0, %s104
      %s122 = sphi 0, %s122
      %s124 = sphi 0, %s122
      %s125 = sphi 0, %s124
      %s139 = sphi 0, %s125
      %s143 = sphi 0, %s143
      %s145 = sphi 0, %s143
      %s146 = sphi 0, %s145
      %s160 = sphi 0, %s146
      %s164 = sphi 0, %s164
      %s166 = sphi 0, %s164
      %s167 = sphi 0, %s166
      %s181 = sphi 0, %s167
      %s185 = sphi 0, %s185
      %s187 = sphi 0, %s185
      %s188 = sphi 0, %s187
      %s202 = sphi 0, %s188
      %s206 = sphi 0, %s206
      %s208 = sphi 0, %s206
      %s209 = sphi 0, %s208
      %s223 = sphi 0, %s209
      %s227 = sphi 0, %s227
      %s229 = sphi 0, %s227
      %s230 = sphi 0, %s229
      %s244 = sphi 0, %s230
      %s248 = sphi 0, %s248
      %s250 = sphi 0, %s248
      %s251 = sphi 0, %s250
      %s265 = sphi 0, %s251
      %s271 = sphi 0, %s273
      %s274 = sphi 0, %s271
      %s275 = sphi 0, %s274
      %s291 = sphi 0, %s275
    $region4: #{tpu_custom_call.1} parent=1 // loop_header_branch
      %30 = sbr.rel (%p28) target = $region8
    $region5: #{tpu_custom_call.1} parent=1 // loop_body
      %s32 = ssub.s32 %s27, 1
      %s33 = ssub.s32 %s27, 2
      %s40 = sadd.s32 1, %s35
      %p41 = scmp.ge.s32.totalorder %s40, 4
      %s42 = scalar_select %p41, 0, %s40
      %s43 = sadd.s32 1, %s34
      %s44 = scalar_select %p41, %s43, %s34
      %p45 = scmp.ge.s32.totalorder %s44, 2
      %s46 = scalar_select %p45, 0, %s44
      %s47 = ssub.s32 %s34, %s46
      %s48 = ssub.s32 %s35, %s42
      %s49 = sor.u32 %s47, %s48
      %p50 = scmp.eq.s32.totalorder %s49, 0
      %s52 = sadd.s32 %s51, 1
      %s53 = scalar_select %p50, %s51, %s52
      %p56 = pneg %p50
      %p57 = scmp.eq.s32.totalorder %s27, 7
      %p58 = por %p56, %p57
      %p59 = scmp.ne.s32.totalorder %s51, %s54
      %p60 = scmp.eq.s32.totalorder %s27, 0
      %p61 = por %p59, %p60
      %p62 = scmp.ne.s32.totalorder %s51, %s54
      %p63 = scmp.eq.s32.totalorder %s32, 7
      %p64 = por %p62, %p63
      %p65 = scmp.ne.s32.totalorder %s54, %s55
      %p66 = scmp.eq.s32.totalorder %s32, 0
      %p67 = por %p65, %p66
      %p68 = scmp.ne.s32.totalorder %s54, %s55
      %p69 = scmp.eq.s32.totalorder %s33, 7
      %p70 = por %p68, %p69
      %p72 = scmp.ne.s32.totalorder %s55, %s71
      %p73 = scmp.eq.s32.totalorder %s33, 0
      %p74 = por %p72, %p73
      %s75 = ssub.s32 %s35, %s42
      %p76 = scmp.eq.s32.totalorder %s75, 0
      %s78 = sadd.s32 %s77, 1
      %s79 = scalar_select %p76, %s77, %s78
      %p82 = pneg %p76
      %p83 = scmp.eq.s32.totalorder %s27, 7
      %p84 = por %p82, %p83
      %p85 = scmp.ne.s32.totalorder %s77, %s80
      %p86 = scmp.eq.s32.totalorder %s27, 0
      %p87 = por %p85, %p86
      %p88 = scmp.ne.s32.totalorder %s77, %s80
      %p89 = scmp.eq.s32.totalorder %s32, 7
      %p90 = por %p88, %p89
      %p91 = scmp.ne.s32.totalorder %s80, %s81
      %p92 = scmp.eq.s32.totalorder %s32, 0
      %p93 = por %p91, %p92
      %p94 = scmp.ne.s32.totalorder %s80, %s81
      %p95 = scmp.eq.s32.totalorder %s33, 7
      %p96 = por %p94, %p95
      %p98 = scmp.ne.s32.totalorder %s81, %s97
      %p99 = scmp.eq.s32.totalorder %s33, 0
      %p100 = por %p98, %p99
      %s102 = sadd.s32 %s101, 1
      %p105 = scmp.eq.s32.totalorder %s27, 7
      %p106 = scmp.ne.s32.totalorder %s101, %s103
      %p107 = scmp.eq.s32.totalorder %s27, 0
      %p108 = por %p106, %p107
      %p109 = scmp.ne.s32.totalorder %s101, %s103
      %p110 = scmp.eq.s32.totalorder %s32, 7
      %p111 = por %p109, %p110
      %p112 = scmp.ne.s32.totalorder %s103, %s104
      %p113 = scmp.eq.s32.totalorder %s32, 0
      %p114 = por %p112, %p113
      %p115 = scmp.ne.s32.totalorder %s103, %s104
      %p116 = scmp.eq.s32.totalorder %s33, 7
      %p117 = por %p115, %p116
      %p119 = scmp.ne.s32.totalorder %s104, %s118
      %p120 = scmp.eq.s32.totalorder %s33, 0
      %p121 = por %p119, %p120
      %s123 = sadd.s32 %s122, 1
      %p126 = scmp.eq.s32.totalorder %s27, 7
      %p127 = scmp.ne.s32.totalorder %s122, %s124
      %p128 = scmp.eq.s32.totalorder %s27, 0
      %p129 = por %p127, %p128
      %p130 = scmp.ne.s32.totalorder %s122, %s124
      %p131 = scmp.eq.s32.totalorder %s32, 7
      %p132 = por %p130, %p131
      %p133 = scmp.ne.s32.totalorder %s124, %s125
      %p134 = scmp.eq.s32.totalorder %s32, 0
      %p135 = por %p133, %p134
      %p136 = scmp.ne.s32.totalorder %s124, %s125
      %p137 = scmp.eq.s32.totalorder %s33, 7
      %p138 = por %p136, %p137
      %p140 = scmp.ne.s32.totalorder %s125, %s139
      %p141 = scmp.eq.s32.totalorder %s33, 0
      %p142 = por %p140, %p141
      %s144 = sadd.s32 %s143, 1
      %p147 = scmp.eq.s32.totalorder %s27, 7
      %p148 = scmp.ne.s32.totalorder %s143, %s145
      %p149 = scmp.eq.s32.totalorder %s27, 0
      %p150 = por %p148, %p149
      %p151 = scmp.ne.s32.totalorder %s143, %s145
      %p152 = scmp.eq.s32.totalorder %s32, 7
      %p153 = por %p151, %p152
      %p154 = scmp.ne.s32.totalorder %s145, %s146
      %p155 = scmp.eq.s32.totalorder %s32, 0
      %p156 = por %p154, %p155
      %p157 = scmp.ne.s32.totalorder %s145, %s146
      %p158 = scmp.eq.s32.totalorder %s33, 7
      %p159 = por %p157, %p158
      %p161 = scmp.ne.s32.totalorder %s146, %s160
      %p162 = scmp.eq.s32.totalorder %s33, 0
      %p163 = por %p161, %p162
      %s165 = sadd.s32 %s164, 1
      %p168 = scmp.eq.s32.totalorder %s27, 7
      %p169 = scmp.ne.s32.totalorder %s164, %s166
      %p170 = scmp.eq.s32.totalorder %s27, 0
      %p171 = por %p169, %p170
      %p172 = scmp.ne.s32.totalorder %s164, %s166
      %p173 = scmp.eq.s32.totalorder %s32, 7
      %p174 = por %p172, %p173
      %p175 = scmp.ne.s32.totalorder %s166, %s167
      %p176 = scmp.eq.s32.totalorder %s32, 0
      %p177 = por %p175, %p176
      %p178 = scmp.ne.s32.totalorder %s166, %s167
      %p179 = scmp.eq.s32.totalorder %s33, 7
      %p180 = por %p178, %p179
      %p182 = scmp.ne.s32.totalorder %s167, %s181
      %p183 = scmp.eq.s32.totalorder %s33, 0
      %p184 = por %p182, %p183
      %s186 = sadd.s32 %s185, 1
      %p189 = scmp.eq.s32.totalorder %s27, 7
      %p190 = scmp.ne.s32.totalorder %s185, %s187
      %p191 = scmp.eq.s32.totalorder %s27, 0
      %p192 = por %p190, %p191
      %p193 = scmp.ne.s32.totalorder %s185, %s187
      %p194 = scmp.eq.s32.totalorder %s32, 7
      %p195 = por %p193, %p194
      %p196 = scmp.ne.s32.totalorder %s187, %s188
      %p197 = scmp.eq.s32.totalorder %s32, 0
      %p198 = por %p196, %p197
      %p199 = scmp.ne.s32.totalorder %s187, %s188
      %p200 = scmp.eq.s32.totalorder %s33, 7
      %p201 = por %p199, %p200
      %p203 = scmp.ne.s32.totalorder %s188, %s202
      %p204 = scmp.eq.s32.totalorder %s33, 0
      %p205 = por %p203, %p204
      %s207 = sadd.s32 %s206, 1
      %p210 = scmp.eq.s32.totalorder %s27, 7
      %p211 = scmp.ne.s32.totalorder %s206, %s208
      %p212 = scmp.eq.s32.totalorder %s27, 0
      %p213 = por %p211, %p212
      %p214 = scmp.ne.s32.totalorder %s206, %s208
      %p215 = scmp.eq.s32.totalorder %s32, 7
      %p216 = por %p214, %p215
      %p217 = scmp.ne.s32.totalorder %s208, %s209
      %p218 = scmp.eq.s32.totalorder %s32, 0
      %p219 = por %p217, %p218
      %p220 = scmp.ne.s32.totalorder %s208, %s209
      %p221 = scmp.eq.s32.totalorder %s33, 7
      %p222 = por %p220, %p221
      %p224 = scmp.ne.s32.totalorder %s209, %s223
      %p225 = scmp.eq.s32.totalorder %s33, 0
      %p226 = por %p224, %p225
      %s228 = sadd.s32 %s227, 1
      %p231 = scmp.eq.s32.totalorder %s27, 7
      %p232 = scmp.ne.s32.totalorder %s227, %s229
      %p233 = scmp.eq.s32.totalorder %s27, 0
      %p234 = por %p232, %p233
      %p235 = scmp.ne.s32.totalorder %s227, %s229
      %p236 = scmp.eq.s32.totalorder %s32, 7
      %p237 = por %p235, %p236
      %p238 = scmp.ne.s32.totalorder %s229, %s230
      %p239 = scmp.eq.s32.totalorder %s32, 0
      %p240 = por %p238, %p239
      %p241 = scmp.ne.s32.totalorder %s229, %s230
      %p242 = scmp.eq.s32.totalorder %s33, 7
      %p243 = por %p241, %p242
      %p245 = scmp.ne.s32.totalorder %s230, %s244
      %p246 = scmp.eq.s32.totalorder %s33, 0
      %p247 = por %p245, %p246
      %s249 = sadd.s32 %s248, 1
      %p252 = scmp.eq.s32.totalorder %s27, 7
      %p253 = scmp.ne.s32.totalorder %s248, %s250
      %p254 = scmp.eq.s32.totalorder %s27, 0
      %p255 = por %p253, %p254
      %p256 = scmp.ne.s32.totalorder %s248, %s250
      %p257 = scmp.eq.s32.totalorder %s32, 7
      %p258 = por %p256, %p257
      %p259 = scmp.ne.s32.totalorder %s250, %s251
      %p260 = scmp.eq.s32.totalorder %s32, 0
      %p261 = por %p259, %p260
      %p262 = scmp.ne.s32.totalorder %s250, %s251
      %p263 = scmp.eq.s32.totalorder %s33, 7
      %p264 = por %p262, %p263
      %p266 = scmp.ne.s32.totalorder %s251, %s265
      %p267 = scmp.eq.s32.totalorder %s33, 0
      %p268 = por %p266, %p267
      %s269 = ssub.s32 %s34, %s46
      %p270 = scmp.eq.s32.totalorder %s269, 0
      %s272 = sadd.s32 %s271, 1
      %s273 = scalar_select %p270, %s271, %s272
      %p276 = pneg %p270
      %p277 = scmp.eq.s32.totalorder %s27, 7
      %p278 = por %p276, %p277
      %p279 = scmp.ne.s32.totalorder %s271, %s274
      %p280 = scmp.eq.s32.totalorder %s27, 0
      %p281 = por %p279, %p280
      %p282 = scmp.ne.s32.totalorder %s271, %s274
      %p283 = scmp.eq.s32.totalorder %s32, 7
      %p284 = por %p282, %p283
      %p285 = scmp.ne.s32.totalorder %s274, %s275
      %p286 = scmp.eq.s32.totalorder %s32, 0
      %p287 = por %p285, %p286
      %p288 = scmp.ne.s32.totalorder %s274, %s275
      %p289 = scmp.eq.s32.totalorder %s33, 7
      %p290 = por %p288, %p289
      %p292 = scmp.ne.s32.totalorder %s275, %s291
      %p293 = scmp.eq.s32.totalorder %s33, 0
      %p294 = por %p292, %p293
      %p295 = scmp.le.s32.totalorder 1, %s27
      %p296 = scmp.lt.s32.totalorder %s27, 9
      %p297 = pnand %p295, %p296
      %p298 = pneg %p297
      // Predicated region
      $region9: #{tpu_custom_call.1} parent=5 // pred_check
        _
      $region10: #{tpu_custom_call.1} parent=5 // pred_check_branch
        %300 = sbr.rel (%p297) target = $region12
      $region11: #{tpu_custom_call.1} parent=5 // pred_region
        %s301 = ssub.s32 %s27, 1
        // Predicated region
        $region13: #{tpu_custom_call.1} parent=11 // pred_check
          %p302 = pneg %p114
        $region14: #{tpu_custom_call.1} parent=11 // pred_check_branch
          %304 = sbr.rel (%p302) target = $region16
        $region15: #{tpu_custom_call.1} parent=11 // pred_region
          %s306 = ssub.s32 2048, 2048
          %307 = vsyncadd [#allocation7], %s306
          %s308 = sshll.u32 [#allocation8], 4
          %s309 = int_to_ptr.vmem [resolvable:$true] %s308
          %314 = dma.hbm_to_vmem [thread:$0]  %s2, 2048, %s309, [#allocation7], 128, 128, 8
        $region16: #{tpu_custom_call.1} parent=11 // pred_fallthru
          _
        // Predicated region
        $region17: #{tpu_custom_call.1} parent=11 // pred_check
          %p315 = pneg %p135
        $region18: #{tpu_custom_call.1} parent=11 // pred_check_branch
          %317 = sbr.rel (%p315) target = $region20
        $region19: #{tpu_custom_call.1} parent=11 // pred_region
          _
        $region20: #{tpu_custom_call.1} parent=11 // pred_fallthru
          _
        // Predicated region
        $region21: #{tpu_custom_call.1} parent=11 // pred_check
          %p318 = pneg %p156
        $region22: #{tpu_custom_call.1} parent=11 // pred_check_branch
          %320 = sbr.rel (%p318) target = $region24
        $region23: #{tpu_custom_call.1} parent=11 // pred_region
          %s322 = ssub.s32 2048, 2048
          %323 = vsyncadd [#allocation10], %s322
          %s324 = sshll.u32 [#allocation9], 4
          %s325 = int_to_ptr.vmem [resolvable:$true] %s324
          %330 = dma.hbm_to_vmem [thread:$0]  %s4, 2048, %s325, [#allocation10], 128, 128, 8
        $region24: #{tpu_custom_call.1} parent=11 // pred_fallthru
          _
        // Predicated region
        $region25: #{tpu_custom_call.1} parent=11 // pred_check
          %p331 = pneg %p177
        $region26: #{tpu_custom_call.1} parent=11 // pred_check_branch
          %333 = sbr.rel (%p331) target = $region28
        $region27: #{tpu_custom_call.1} parent=11 // pred_region
          _
        $region28: #{tpu_custom_call.1} parent=11 // pred_fallthru
          _
        // Predicated region
        $region29: #{tpu_custom_call.1} parent=11 // pred_check
          %p334 = pneg %p198
        $region30: #{tpu_custom_call.1} parent=11 // pred_check_branch
          %336 = sbr.rel (%p334) target = $region32
        $region31: #{tpu_custom_call.1} parent=11 // pred_region
          %s338 = ssub.s32 2048, 2048
          %339 = vsyncadd [#allocation10], %s338
          %s340 = sshll.u32 [#allocation11], 4
          %s341 = int_to_ptr.vmem [resolvable:$true] %s340
          %346 = dma.hbm_to_vmem [thread:$0]  %s6, 2048, %s341, [#allocation10], 128, 128, 8
        $region32: #{tpu_custom_call.1} parent=11 // pred_fallthru
          _
        // Predicated region
        $region33: #{tpu_custom_call.1} parent=11 // pred_check
          %p347 = pneg %p219
        $region34: #{tpu_custom_call.1} parent=11 // pred_check_branch
          %349 = sbr.rel (%p347) target = $region36
        $region35: #{tpu_custom_call.1} parent=11 // pred_region
          _
        $region36: #{tpu_custom_call.1} parent=11 // pred_fallthru
          _
        // Predicated region
        $region37: #{tpu_custom_call.1} parent=11 // pred_check
          %p350 = pneg %p240
        $region38: #{tpu_custom_call.1} parent=11 // pred_check_branch
          %352 = sbr.rel (%p350) target = $region40
        $region39: #{tpu_custom_call.1} parent=11 // pred_region
          %s354 = ssub.s32 2048, 2048
          %355 = vsyncadd [#allocation13], %s354
          %s356 = sshll.u32 [#allocation12], 4
          %s357 = int_to_ptr.vmem [resolvable:$true] %s356
          %362 = dma.hbm_to_vmem [thread:$0]  %s8, 2048, %s357, [#allocation13], 128, 128, 8
        $region40: #{tpu_custom_call.1} parent=11 // pred_fallthru
          _
        // Predicated region
        $region41: #{tpu_custom_call.1} parent=11 // pred_check
          %p363 = pneg %p261
        $region42: #{tpu_custom_call.1} parent=11 // pred_check_branch
          %365 = sbr.rel (%p363) target = $region44
        $region43: #{tpu_custom_call.1} parent=11 // pred_region
          _
        $region44: #{tpu_custom_call.1} parent=11 // pred_fallthru
          _
      $region12: #{tpu_custom_call.1} parent=5 // pred_fallthru
        _
      %p366 = scmp.lt.s32.totalorder %s27, 8
      // Predicated region
      $region45: #{tpu_custom_call.1} parent=5 // pred_check
        %p367 = pneg %p366
      $region46: #{tpu_custom_call.1} parent=5 // pred_check_branch
        %369 = sbr.rel (%p367) target = $region48
      $region47: #{tpu_custom_call.1} parent=5 // pred_region
        // Predicated region
        $region49: #{tpu_custom_call.1} parent=47 // pred_check
          %p370 = pneg %p61
        $region50: #{tpu_custom_call.1} parent=47 // pred_check_branch
          %372 = sbr.rel (%p370) target = $region52
        $region51: #{tpu_custom_call.1} parent=47 // pred_region
          %s373 = sand.u32 %s51, 1
          %s374 = scalar_lea.sflag [#allocation4], %s373
          %s375 = sand.u32 %s51, 1
          %s376 = smul.addr %s375, 8
          %s377 = scalar_lea.vmem [#allocation3], %s376
          %s378 = smul.u32 2, %s35
          %s380 = ssub.s32 128, 128
          %381 = vsyncadd %s374, %s380
          %s382 = smul.addr %s34, 8
          %s383 = sadd.s32 %s378, %s382
          %s384 = smul.addr %s383, 64
          %s385 = scalar_lea.hbm %s0, %s384
          %s387 = sshll.u32 %s377, 4
          %s388 = int_to_ptr.vmem [resolvable:$true] %s387
          %390 = dma.hbm_to_vmem [thread:$0]  %s385, 128, %s388, %s374
        $region52: #{tpu_custom_call.1} parent=47 // pred_fallthru
          _
        // Predicated region
        $region53: #{tpu_custom_call.1} parent=47 // pred_check
          %p391 = pneg %p87
        $region54: #{tpu_custom_call.1} parent=47 // pred_check_branch
          %393 = sbr.rel (%p391) target = $region56
        $region55: #{tpu_custom_call.1} parent=47 // pred_region
          %s394 = sand.u32 %s27, 1
          %s395 = scalar_lea.sflag [#allocation7], %s394
          %s396 = sand.u32 %s77, 1
          %s397 = smul.addr %s396, 128
          %s398 = scalar_lea.vmem [#allocation6], %s397
          %s399 = smul.u32 32, %s35
          %s401 = ssub.s32 2048, 2048
          %402 = vsyncadd %s395, %s401
          %s403 = smul.addr %s399, 64
          %s404 = scalar_lea.hbm %s1, %s403
          %s405 = sshll.u32 %s398, 4
          %s406 = int_to_ptr.vmem [resolvable:$true] %s405
          %411 = dma.hbm_to_vmem [thread:$0]  %s404, 2048, %s406, %s395, 64, 64, 4
        $region56: #{tpu_custom_call.1} parent=47 // pred_fallthru
          _
      $region48: #{tpu_custom_call.1} parent=5 // pred_fallthru
        _
      %p412 = scmp.le.s32.totalorder 1, %s27
      %p413 = scmp.lt.s32.totalorder %s27, 9
      %p414 = pnand %p412, %p413
      %p415 = pneg %p414
      // Predicated region
      $region57: #{tpu_custom_call.1} parent=5 // pred_check
        _
      $region58: #{tpu_custom_call.1} parent=5 // pred_check_branch
        %417 = sbr.rel (%p414) target = $region60
      $region59: #{tpu_custom_call.1} parent=5 // pred_region
        %s418 = ssub.s32 %s27, 1
        %s419 = sand.u32 %s54, 1
        %s420 = scalar_lea.sflag [#allocation4], %s419
        %s421 = sand.u32 %s54, 1
        %s422 = smul.addr %s421, 8
        %s423 = scalar_lea.vmem [#allocation3], %s422
        // Predicated region
        $region61: #{tpu_custom_call.1} parent=59 // pred_check
          %p424 = pneg %p67
        $region62: #{tpu_custom_call.1} parent=59 // pred_check_branch
          %426 = sbr.rel (%p424) target = $region64
        $region63: #{tpu_custom_call.1} parent=59 // pred_region
          %427 = dma.done %s420, 128
        $region64: #{tpu_custom_call.1} parent=59 // pred_fallthru
          _
        %s428 = sand.u32 %s32, 1
        %s429 = scalar_lea.sflag [#allocation7], %s428
        %s430 = sand.u32 %s80, 1
        %s431 = smul.addr %s430, 128
        %s432 = scalar_lea.vmem [#allocation6], %s431
        // Predicated region
        $region65: #{tpu_custom_call.1} parent=59 // pred_check
          %p433 = pneg %p93
        $region66: #{tpu_custom_call.1} parent=59 // pred_check_branch
          %435 = sbr.rel (%p433) target = $region68
        $region67: #{tpu_custom_call.1} parent=59 // pred_region
          %436 = dma.done %s429, 2048
        $region68: #{tpu_custom_call.1} parent=59 // pred_fallthru
          _
        // Predicated region
        $region69: #{tpu_custom_call.1} parent=59 // pred_check
          %p437 = pneg %p114
        $region70: #{tpu_custom_call.1} parent=59 // pred_check_branch
          %439 = sbr.rel (%p437) target = $region72
        $region71: #{tpu_custom_call.1} parent=59 // pred_region
          %440 = dma.done [#allocation7], 2048
        $region72: #{tpu_custom_call.1} parent=59 // pred_fallthru
          _
        // Predicated region
        $region73: #{tpu_custom_call.1} parent=59 // pred_check
          %p441 = pneg %p156
        $region74: #{tpu_custom_call.1} parent=59 // pred_check_branch
          %443 = sbr.rel (%p441) target = $region76
        $region75: #{tpu_custom_call.1} parent=59 // pred_region
          %444 = dma.done [#allocation10], 2048
        $region76: #{tpu_custom_call.1} parent=59 // pred_fallthru
          _
        // Predicated region
        $region77: #{tpu_custom_call.1} parent=59 // pred_check
          %p445 = pneg %p198
        $region78: #{tpu_custom_call.1} parent=59 // pred_check_branch
          %447 = sbr.rel (%p445) target = $region80
        $region79: #{tpu_custom_call.1} parent=59 // pred_region
          %448 = dma.done [#allocation10], 2048
        $region80: #{tpu_custom_call.1} parent=59 // pred_fallthru
          _
        // Predicated region
        $region81: #{tpu_custom_call.1} parent=59 // pred_check
          %p449 = pneg %p240
        $region82: #{tpu_custom_call.1} parent=59 // pred_check_branch
          %451 = sbr.rel (%p449) target = $region84
        $region83: #{tpu_custom_call.1} parent=59 // pred_region
          %452 = dma.done [#allocation13], 2048
        $region84: #{tpu_custom_call.1} parent=59 // pred_fallthru
          _
        %s453 = sand.u32 %s54, 1
        %s454 = scalar_lea.sflag [#allocation4], %s453
        %s455 = sand.u32 %s54, 1
        %s456 = smul.addr %s455, 8
        %s457 = scalar_lea.vmem [#allocation3], %s456
        %p458 = pneg %p67
        %p459 = pneg %p64
        %s460 = sand.u32 %s32, 1
        %s461 = scalar_lea.sflag [#allocation7], %s460
        %s462 = sand.u32 %s80, 1
        %s463 = smul.addr %s462, 128
        %s464 = scalar_lea.vmem [#allocation6], %s463
        %p465 = pneg %p93
        %p466 = pneg %p90
        %p467 = pneg %p114
        %p468 = pneg %p111
        %p469 = pneg %p135
        %p470 = pneg %p132
        %p471 = pneg %p156
        %p472 = pneg %p153
        %p473 = pneg %p177
        %p474 = pneg %p174
        %p475 = pneg %p198
        %p476 = pneg %p195
        %p477 = pneg %p219
        %p478 = pneg %p216
        %p479 = pneg %p240
        %p480 = pneg %p237
        %p481 = pneg %p261
        %p482 = pneg %p258
        %p483 = pneg %p287
        %p484 = pneg %p284
        %s485 = sand.u32 %s274, 1
        %s486 = scalar_lea.sflag [#allocation5], %s485
        %s487 = sand.u32 %s274, 1
        %s488 = smul.addr %s487, 8
        %s489 = scalar_lea.vmem [#allocation14], %s488
        %s490 = smul.u32 2, %s37
        %s491 = smul.u32 32, %s37
        %p493 = scmp.eq.s32.totalorder %s37, 0
        // Predicated region
        $region85: #{tpu_custom_call.1} parent=59 // pred_check
          %p494 = pneg %p493
        $region86: #{tpu_custom_call.1} parent=59 // pred_check_branch
          %496 = sbr.rel (%p494) target = $region88
        $region87: #{tpu_custom_call.1} parent=59 // pred_region
          %497 = vst [vmem:[#allocation2] sm:$0xff] 0.0
        $region88: #{tpu_custom_call.1} parent=59 // pred_fallthru
          _
        %v498 = vld [vmem:[#allocation2] sm:$0xff]
        %v499 = vld [vmem:[%s423] sm:$0xff]
        %v500 = vld [vmem:[%s432] sm:$0xf]
        %v501 = vld [vmem:[%s432 + $0x4] sm:$0xf]
        %v502 = vld [vmem:[%s432 + $0x8] sm:$0xf]
        %v503 = vld [vmem:[%s432 + $0xc] sm:$0xf]
        %v504 = vld [vmem:[%s432 + $0x10] sm:$0xf]
        %v505 = vld [vmem:[%s432 + $0x14] sm:$0xf]
        %v506 = vld [vmem:[%s432 + $0x18] sm:$0xf]
        %v507 = vld [vmem:[%s432 + $0x1c] sm:$0xf]
        %v508 = vld [vmem:[%s432 + $0x20] sm:$0xf]
        %v509 = vld [vmem:[%s432 + $0x24] sm:$0xf]
        %v510 = vld [vmem:[%s432 + $0x28] sm:$0xf]
        %v511 = vld [vmem:[%s432 + $0x2c] sm:$0xf]
        %v512 = vld [vmem:[%s432 + $0x30] sm:$0xf]
        %v513 = vld [vmem:[%s432 + $0x34] sm:$0xf]
        %v514 = vld [vmem:[%s432 + $0x38] sm:$0xf]
        %v515 = vld [vmem:[%s432 + $0x3c] sm:$0xf]
        %v516 = vld [vmem:[%s432 + $0x40] sm:$0xf]
        %v517 = vld [vmem:[%s432 + $0x44] sm:$0xf]
        %v518 = vld [vmem:[%s432 + $0x48] sm:$0xf]
        %v519 = vld [vmem:[%s432 + $0x4c] sm:$0xf]
        %v520 = vld [vmem:[%s432 + $0x50] sm:$0xf]
        %v521 = vld [vmem:[%s432 + $0x54] sm:$0xf]
        %v522 = vld [vmem:[%s432 + $0x58] sm:$0xf]
        %v523 = vld [vmem:[%s432 + $0x5c] sm:$0xf]
        %v524 = vld [vmem:[%s432 + $0x60] sm:$0xf]
        %v525 = vld [vmem:[%s432 + $0x64] sm:$0xf]
        %v526 = vld [vmem:[%s432 + $0x68] sm:$0xf]
        %v527 = vld [vmem:[%s432 + $0x6c] sm:$0xf]
        %v528 = vld [vmem:[%s432 + $0x70] sm:$0xf]
        %v529 = vld [vmem:[%s432 + $0x74] sm:$0xf]
        %v530 = vld [vmem:[%s432 + $0x78] sm:$0xf]
        %v531 = vld [vmem:[%s432 + $0x7c] sm:$0xf]
        %v533 = vunpack.c.l.b16 %v499
        %v534 = vunpack.c.h.b16 %v499
        %v535 = vpack.c.b16 %v533, %v533
        %v536 = vpack.c.b16 %v534, %v534
        %v571 = vunpack.c.l.b16 %v500
        %v572 = vunpack.c.l.b16 %v501
        %v573 = vunpack.c.l.b16 %v502
        %v574 = vunpack.c.l.b16 %v503
        %v575 = vunpack.c.l.b16 %v504
        %v576 = vunpack.c.l.b16 %v505
        %v577 = vunpack.c.l.b16 %v506
        %v578 = vunpack.c.l.b16 %v507
        %v579 = vunpack.c.l.b16 %v508
        %v580 = vunpack.c.l.b16 %v509
        %v581 = vunpack.c.l.b16 %v510
        %v582 = vunpack.c.l.b16 %v511
        %v583 = vunpack.c.l.b16 %v512
        %v584 = vunpack.c.l.b16 %v513
        %v585 = vunpack.c.l.b16 %v514
        %v586 = vunpack.c.l.b16 %v515
        %v587 = vunpack.c.l.b16 %v516
        %v588 = vunpack.c.l.b16 %v517
        %v589 = vunpack.c.l.b16 %v518
        %v590 = vunpack.c.l.b16 %v519
        %v591 = vunpack.c.l.b16 %v520
        %v592 = vunpack.c.l.b16 %v521
        %v593 = vunpack.c.l.b16 %v522
        %v594 = vunpack.c.l.b16 %v523
        %v595 = vunpack.c.l.b16 %v524
        %v596 = vunpack.c.l.b16 %v525
        %v597 = vunpack.c.l.b16 %v526
        %v598 = vunpack.c.l.b16 %v527
        %v599 = vunpack.c.l.b16 %v528
        %v600 = vunpack.c.l.b16 %v529
        %v601 = vunpack.c.l.b16 %v530
        %v602 = vunpack.c.l.b16 %v531
        %v603 = vpack.c.b16 %v572, %v571
        %v604 = vpack.c.b16 %v574, %v573
        %v605 = vpack.c.b16 %v576, %v575
        %v606 = vpack.c.b16 %v578, %v577
        %v607 = vpack.c.b16 %v580, %v579
        %v608 = vpack.c.b16 %v582, %v581
        %v609 = vpack.c.b16 %v584, %v583
        %v610 = vpack.c.b16 %v586, %v585
        %v611 = vpack.c.b16 %v588, %v587
        %v612 = vpack.c.b16 %v590, %v589
        %v613 = vpack.c.b16 %v592, %v591
        %v614 = vpack.c.b16 %v594, %v593
        %v615 = vpack.c.b16 %v596, %v595
        %v616 = vpack.c.b16 %v598, %v597
        %v617 = vpack.c.b16 %v600, %v599
        %v618 = vpack.c.b16 %v602, %v601
        %635 = vmatprep.subr.bf16.mxu0 0
        %636 = vmatpush1.bf16.msra.mxu0 %v610
        %637 = vmatprep.subr.bf16.mxu0 0
        %638 = vmatpush1.bf16.msra.mxu0 %v609
        %639 = vmatprep.subr.bf16.mxu0 0
        %640 = vmatpush1.bf16.msra.mxu0 %v608
        %641 = vmatprep.subr.bf16.mxu0 0
        %642 = vmatpush1.bf16.msra.mxu0 %v607
        %643 = vmatprep.subr.bf16.mxu0 0
        %644 = vmatpush1.bf16.msra.mxu0 %v606
        %645 = vmatprep.subr.bf16.mxu0 0
        %646 = vmatpush1.bf16.msra.mxu0 %v605
        %647 = vmatprep.subr.bf16.mxu0 0
        %648 = vmatpush1.bf16.msra.mxu0 %v604
        %649 = vmatprep.subr.bf16.mxu0 0
        %650 = vmatpush1.bf16.msra.mxu0 %v603
        %651 = vmatprep.subr.bf16.mxu0 0
        %652 = vmatpush2.bf16.msra.mxu0 %v618
        %653 = vmatprep.subr.bf16.mxu0 0
        %654 = vmatpush2.bf16.msra.mxu0 %v617
        %655 = vmatprep.subr.bf16.mxu0 0
        %656 = vmatpush2.bf16.msra.mxu0 %v616
        %657 = vmatprep.subr.bf16.mxu0 0
        %658 = vmatpush2.bf16.msra.mxu0 %v615
        %659 = vmatprep.subr.bf16.mxu0 0
        %660 = vmatpush2.bf16.msra.mxu0 %v614
        %661 = vmatprep.subr.bf16.mxu0 0
        %662 = vmatpush2.bf16.msra.mxu0 %v613
        %663 = vmatprep.subr.bf16.mxu0 0
        %664 = vmatpush2.bf16.msra.mxu0 %v612
        %665 = vmatprep.subr.bf16.mxu0 0
        %666 = vmatpush2.bf16.msra.mxu0 %v611
        %667 = vmatprep.mubr.bf16.mxu0 %v536
        %668 = vmatmul.mubr.bf16.gmra.mxu0 %v535
        %v669 = vpop.f32.mrf.mxu0
        %v670 = vadd.f32 0.0, %v669
        %v671 = vpop.f32.mrf.mxu0
        %v672 = vpop.f32.mrf.mxu0
        %v673 = vpop.f32.mrf.mxu0
        %674 = vdwg.mxu0
        %v675 = vadd.f32 %v498, %v670
        %676 = vst [vmem:[#allocation2] sm:$0xff] %v675
        %p677 = scmp.eq.s32.totalorder %s37, 3
        // Predicated region
        $region89: #{tpu_custom_call.1} parent=59 // pred_check
          %p678 = pneg %p677
        $region90: #{tpu_custom_call.1} parent=59 // pred_check_branch
          %680 = sbr.rel (%p678) target = $region92
        $region91: #{tpu_custom_call.1} parent=59 // pred_region
          %v681 = vld [vmem:[#allocation2] sm:$0xff]
          %v682 = vld [vmem:[#allocation8] sm:$0xff]
          %v683 = vld [vmem:[#allocation8 + $0x8] sm:$0xff]
          %v684 = vld [vmem:[#allocation8 + $0x10] sm:$0xff]
          %v685 = vld [vmem:[#allocation8 + $0x18] sm:$0xff]
          %v686 = vld [vmem:[#allocation8 + $0x20] sm:$0xff]
          %v687 = vld [vmem:[#allocation8 + $0x28] sm:$0xff]
          %v688 = vld [vmem:[#allocation8 + $0x30] sm:$0xff]
          %v689 = vld [vmem:[#allocation8 + $0x38] sm:$0xff]
          %v690 = vld [vmem:[#allocation8 + $0x40] sm:$0xff]
          %v691 = vld [vmem:[#allocation8 + $0x48] sm:$0xff]
          %v692 = vld [vmem:[#allocation8 + $0x50] sm:$0xff]
          %v693 = vld [vmem:[#allocation8 + $0x58] sm:$0xff]
          %v694 = vld [vmem:[#allocation8 + $0x60] sm:$0xff]
          %v695 = vld [vmem:[#allocation8 + $0x68] sm:$0xff]
          %v696 = vld [vmem:[#allocation8 + $0x70] sm:$0xff]
          %v697 = vld [vmem:[#allocation8 + $0x78] sm:$0xff]
          %v698 = vld [vmem:[%s3] sm:$0x1]
          %v700 = vlaneseq
          %v701 = vshrl.u32 %v700, 7
          %v702 = vsub.s32 0, %v701
          %v703 = vrot.slane %v698, %v702
          %705 = vmatprep.subr.mxu0 0.0
          %706 = vmatpush1.msra.mxu0 %v697
          %707 = vmatprep.subr.mxu0 0.0
          %708 = vmatpush1.msra.mxu0 %v696
          %709 = vmatprep.subr.mxu0 0.0
          %710 = vmatpush1.msra.mxu0 %v695
          %711 = vmatprep.subr.mxu0 0.0
          %712 = vmatpush1.msra.mxu0 %v694
          %713 = vmatprep.subr.mxu0 0.0
          %714 = vmatpush1.msra.mxu0 %v693
          %715 = vmatprep.subr.mxu0 0.0
          %716 = vmatpush1.msra.mxu0 %v692
          %717 = vmatprep.subr.mxu0 0.0
          %718 = vmatpush1.msra.mxu0 %v691
          %719 = vmatprep.subr.mxu0 0.0
          %720 = vmatpush1.msra.mxu0 %v690
          %721 = vmatprep.subr.mxu0 0.0
          %722 = vmatpush1.msra.mxu0 %v689
          %723 = vmatprep.subr.mxu0 0.0
          %724 = vmatpush1.msra.mxu0 %v688
          %725 = vmatprep.subr.mxu0 0.0
          %726 = vmatpush1.msra.mxu0 %v687
          %727 = vmatprep.subr.mxu0 0.0
          %728 = vmatpush1.msra.mxu0 %v686
          %729 = vmatprep.subr.mxu0 0.0
          %730 = vmatpush1.msra.mxu0 %v685
          %731 = vmatprep.subr.mxu0 0.0
          %732 = vmatpush1.msra.mxu0 %v684
          %733 = vmatprep.subr.mxu0 0.0
          %734 = vmatpush1.msra.mxu0 %v683
          %735 = vmatprep.subr.mxu0 0.0
          %736 = vmatpush1.msra.mxu0 %v682
          %737 = vmatprep.subr.mxu0 0.0
          %738 = vmatpush2.msra.mxu0 0.0
          %739 = vmatprep.subr.mxu0 0.0
          %740 = vmatpush2.msra.mxu0 0.0
          %741 = vmatprep.subr.mxu0 0.0
          %742 = vmatpush2.msra.mxu0 0.0
          %743 = vmatprep.subr.mxu0 0.0
          %744 = vmatpush2.msra.mxu0 0.0
          %745 = vmatprep.subr.mxu0 0.0
          %746 = vmatpush2.msra.mxu0 0.0
          %747 = vmatprep.subr.mxu0 0.0
          %748 = vmatpush2.msra.mxu0 0.0
          %749 = vmatprep.subr.mxu0 0.0
          %750 = vmatpush2.msra.mxu0 0.0
          %751 = vmatprep.subr.mxu0 0.0
          %752 = vmatpush2.msra.mxu0 0.0
          %753 = vmatprep.subr.mxu0 0.0
          %754 = vmatpush2.msra.mxu0 0.0
          %755 = vmatprep.subr.mxu0 0.0
          %756 = vmatpush2.msra.mxu0 0.0
          %757 = vmatprep.subr.mxu0 0.0
          %758 = vmatpush2.msra.mxu0 0.0
          %759 = vmatprep.subr.mxu0 0.0
          %760 = vmatpush2.msra.mxu0 0.0
          %761 = vmatprep.subr.mxu0 0.0
          %762 = vmatpush2.msra.mxu0 0.0
          %763 = vmatprep.subr.mxu0 0.0
          %764 = vmatpush2.msra.mxu0 0.0
          %765 = vmatprep.subr.mxu0 0.0
          %766 = vmatpush2.msra.mxu0 0.0
          %767 = vmatprep.subr.mxu0 0.0
          %768 = vmatpush2.msra.mxu0 0.0
          %769 = vmatprep.mubr.f32.mxu0 0.0
          %770 = vmatmul.mubr.f32.gmra.mxu0 %v681
          %v771 = vpop.f32.mrf.mxu0
          %v772 = vadd.f32 %v703, %v771
          %v773 = vpop.f32.mrf.mxu0
          %774 = vdwg.mxu0
          %v775 = vmax.f32 %v772, 0.0
          %v776 = vld [vmem:[#allocation9] sm:$0xff]
          %v777 = vld [vmem:[#allocation9 + $0x8] sm:$0xff]
          %v778 = vld [vmem:[#allocation9 + $0x10] sm:$0xff]
          %v779 = vld [vmem:[#allocation9 + $0x18] sm:$0xff]
          %v780 = vld [vmem:[#allocation9 + $0x20] sm:$0xff]
          %v781 = vld [vmem:[#allocation9 + $0x28] sm:$0xff]
          %v782 = vld [vmem:[#allocation9 + $0x30] sm:$0xff]
          %v783 = vld [vmem:[#allocation9 + $0x38] sm:$0xff]
          %v784 = vld [vmem:[#allocation9 + $0x40] sm:$0xff]
          %v785 = vld [vmem:[#allocation9 + $0x48] sm:$0xff]
          %v786 = vld [vmem:[#allocation9 + $0x50] sm:$0xff]
          %v787 = vld [vmem:[#allocation9 + $0x58] sm:$0xff]
          %v788 = vld [vmem:[#allocation9 + $0x60] sm:$0xff]
          %v789 = vld [vmem:[#allocation9 + $0x68] sm:$0xff]
          %v790 = vld [vmem:[#allocation9 + $0x70] sm:$0xff]
          %v791 = vld [vmem:[#allocation9 + $0x78] sm:$0xff]
          %v792 = vld [vmem:[%s5] sm:$0x1]
          %v794 = vlaneseq
          %v795 = vshrl.u32 %v794, 7
          %v796 = vsub.s32 0, %v795
          %v797 = vrot.slane %v792, %v796
          %799 = vmatprep.subr.mxu0 0.0
          %800 = vmatpush1.msra.mxu0 %v791
          %801 = vmatprep.subr.mxu0 0.0
          %802 = vmatpush1.msra.mxu0 %v790
          %803 = vmatprep.subr.mxu0 0.0
          %804 = vmatpush1.msra.mxu0 %v789
          %805 = vmatprep.subr.mxu0 0.0
          %806 = vmatpush1.msra.mxu0 %v788
          %807 = vmatprep.subr.mxu0 0.0
          %808 = vmatpush1.msra.mxu0 %v787
          %809 = vmatprep.subr.mxu0 0.0
          %810 = vmatpush1.msra.mxu0 %v786
          %811 = vmatprep.subr.mxu0 0.0
          %812 = vmatpush1.msra.mxu0 %v785
          %813 = vmatprep.subr.mxu0 0.0
          %814 = vmatpush1.msra.mxu0 %v784
          %815 = vmatprep.subr.mxu0 0.0
          %816 = vmatpush1.msra.mxu0 %v783
          %817 = vmatprep.subr.mxu0 0.0
          %818 = vmatpush1.msra.mxu0 %v782
          %819 = vmatprep.subr.mxu0 0.0
          %820 = vmatpush1.msra.mxu0 %v781
          %821 = vmatprep.subr.mxu0 0.0
          %822 = vmatpush1.msra.mxu0 %v780
          %823 = vmatprep.subr.mxu0 0.0
          %824 = vmatpush1.msra.mxu0 %v779
          %825 = vmatprep.subr.mxu0 0.0
          %826 = vmatpush1.msra.mxu0 %v778
          %827 = vmatprep.subr.mxu0 0.0
          %828 = vmatpush1.msra.mxu0 %v777
          %829 = vmatprep.subr.mxu0 0.0
          %830 = vmatpush1.msra.mxu0 %v776
          %831 = vmatprep.subr.mxu0 0.0
          %832 = vmatpush2.msra.mxu0 0.0
          %833 = vmatprep.subr.mxu0 0.0
          %834 = vmatpush2.msra.mxu0 0.0
          %835 = vmatprep.subr.mxu0 0.0
          %836 = vmatpush2.msra.mxu0 0.0
          %837 = vmatprep.subr.mxu0 0.0
          %838 = vmatpush2.msra.mxu0 0.0
          %839 = vmatprep.subr.mxu0 0.0
          %840 = vmatpush2.msra.mxu0 0.0
          %841 = vmatprep.subr.mxu0 0.0
          %842 = vmatpush2.msra.mxu0 0.0
          %843 = vmatprep.subr.mxu0 0.0
          %844 = vmatpush2.msra.mxu0 0.0
          %845 = vmatprep.subr.mxu0 0.0
          %846 = vmatpush2.msra.mxu0 0.0
          %847 = vmatprep.subr.mxu0 0.0
          %848 = vmatpush2.msra.mxu0 0.0
          %849 = vmatprep.subr.mxu0 0.0
          %850 = vmatpush2.msra.mxu0 0.0
          %851 = vmatprep.subr.mxu0 0.0
          %852 = vmatpush2.msra.mxu0 0.0
          %853 = vmatprep.subr.mxu0 0.0
          %854 = vmatpush2.msra.mxu0 0.0
          %855 = vmatprep.subr.mxu0 0.0
          %856 = vmatpush2.msra.mxu0 0.0
          %857 = vmatprep.subr.mxu0 0.0
          %858 = vmatpush2.msra.mxu0 0.0
          %859 = vmatprep.subr.mxu0 0.0
          %860 = vmatpush2.msra.mxu0 0.0
          %861 = vmatprep.subr.mxu0 0.0
          %862 = vmatpush2.msra.mxu0 0.0
          %863 = vmatprep.mubr.f32.mxu0 0.0
          %864 = vmatmul.mubr.f32.gmra.mxu0 %v775
          %v865 = vpop.f32.mrf.mxu0
          %v866 = vadd.f32 %v797, %v865
          %v867 = vpop.f32.mrf.mxu0
          %868 = vdwg.mxu0
          %v869 = vmax.f32 %v866, 0.0
          %v870 = vld [vmem:[#allocation11] sm:$0xff]
          %v871 = vld [vmem:[#allocation11 + $0x8] sm:$0xff]
          %v872 = vld [vmem:[#allocation11 + $0x10] sm:$0xff]
          %v873 = vld [vmem:[#allocation11 + $0x18] sm:$0xff]
          %v874 = vld [vmem:[#allocation11 + $0x20] sm:$0xff]
          %v875 = vld [vmem:[#allocation11 + $0x28] sm:$0xff]
          %v876 = vld [vmem:[#allocation11 + $0x30] sm:$0xff]
          %v877 = vld [vmem:[#allocation11 + $0x38] sm:$0xff]
          %v878 = vld [vmem:[#allocation11 + $0x40] sm:$0xff]
          %v879 = vld [vmem:[#allocation11 + $0x48] sm:$0xff]
          %v880 = vld [vmem:[#allocation11 + $0x50] sm:$0xff]
          %v881 = vld [vmem:[#allocation11 + $0x58] sm:$0xff]
          %v882 = vld [vmem:[#allocation11 + $0x60] sm:$0xff]
          %v883 = vld [vmem:[#allocation11 + $0x68] sm:$0xff]
          %v884 = vld [vmem:[#allocation11 + $0x70] sm:$0xff]
          %v885 = vld [vmem:[#allocation11 + $0x78] sm:$0xff]
          %v886 = vld [vmem:[%s7] sm:$0x1]
          %v888 = vlaneseq
          %v889 = vshrl.u32 %v888, 7
          %v890 = vsub.s32 0, %v889
          %v891 = vrot.slane %v886, %v890
          %893 = vmatprep.subr.mxu0 0.0
          %894 = vmatpush1.msra.mxu0 %v885
          %895 = vmatprep.subr.mxu0 0.0
          %896 = vmatpush1.msra.mxu0 %v884
          %897 = vmatprep.subr.mxu0 0.0
          %898 = vmatpush1.msra.mxu0 %v883
          %899 = vmatprep.subr.mxu0 0.0
          %900 = vmatpush1.msra.mxu0 %v882
          %901 = vmatprep.subr.mxu0 0.0
          %902 = vmatpush1.msra.mxu0 %v881
          %903 = vmatprep.subr.mxu0 0.0
          %904 = vmatpush1.msra.mxu0 %v880
          %905 = vmatprep.subr.mxu0 0.0
          %906 = vmatpush1.msra.mxu0 %v879
          %907 = vmatprep.subr.mxu0 0.0
          %908 = vmatpush1.msra.mxu0 %v878
          %909 = vmatprep.subr.mxu0 0.0
          %910 = vmatpush1.msra.mxu0 %v877
          %911 = vmatprep.subr.mxu0 0.0
          %912 = vmatpush1.msra.mxu0 %v876
          %913 = vmatprep.subr.mxu0 0.0
          %914 = vmatpush1.msra.mxu0 %v875
          %915 = vmatprep.subr.mxu0 0.0
          %916 = vmatpush1.msra.mxu0 %v874
          %917 = vmatprep.subr.mxu0 0.0
          %918 = vmatpush1.msra.mxu0 %v873
          %919 = vmatprep.subr.mxu0 0.0
          %920 = vmatpush1.msra.mxu0 %v872
          %921 = vmatprep.subr.mxu0 0.0
          %922 = vmatpush1.msra.mxu0 %v871
          %923 = vmatprep.subr.mxu0 0.0
          %924 = vmatpush1.msra.mxu0 %v870
          %925 = vmatprep.subr.mxu0 0.0
          %926 = vmatpush2.msra.mxu0 0.0
          %927 = vmatprep.subr.mxu0 0.0
          %928 = vmatpush2.msra.mxu0 0.0
          %929 = vmatprep.subr.mxu0 0.0
          %930 = vmatpush2.msra.mxu0 0.0
          %931 = vmatprep.subr.mxu0 0.0
          %932 = vmatpush2.msra.mxu0 0.0
          %933 = vmatprep.subr.mxu0 0.0
          %934 = vmatpush2.msra.mxu0 0.0
          %935 = vmatprep.subr.mxu0 0.0
          %936 = vmatpush2.msra.mxu0 0.0
          %937 = vmatprep.subr.mxu0 0.0
          %938 = vmatpush2.msra.mxu0 0.0
          %939 = vmatprep.subr.mxu0 0.0
          %940 = vmatpush2.msra.mxu0 0.0
          %941 = vmatprep.subr.mxu0 0.0
          %942 = vmatpush2.msra.mxu0 0.0
          %943 = vmatprep.subr.mxu0 0.0
          %944 = vmatpush2.msra.mxu0 0.0
          %945 = vmatprep.subr.mxu0 0.0
          %946 = vmatpush2.msra.mxu0 0.0
          %947 = vmatprep.subr.mxu0 0.0
          %948 = vmatpush2.msra.mxu0 0.0
          %949 = vmatprep.subr.mxu0 0.0
          %950 = vmatpush2.msra.mxu0 0.0
          %951 = vmatprep.subr.mxu0 0.0
          %952 = vmatpush2.msra.mxu0 0.0
          %953 = vmatprep.subr.mxu0 0.0
          %954 = vmatpush2.msra.mxu0 0.0
          %955 = vmatprep.subr.mxu0 0.0
          %956 = vmatpush2.msra.mxu0 0.0
          %957 = vmatprep.mubr.f32.mxu0 0.0
          %958 = vmatmul.mubr.f32.gmra.mxu0 %v869
          %v959 = vpop.f32.mrf.mxu0
          %v960 = vadd.f32 %v891, %v959
          %v961 = vpop.f32.mrf.mxu0
          %962 = vdwg.mxu0
          %v963 = vmax.f32 %v960, 0.0
          %v964 = vld [vmem:[#allocation12] sm:$0xff]
          %v965 = vld [vmem:[#allocation12 + $0x8] sm:$0xff]
          %v966 = vld [vmem:[#allocation12 + $0x10] sm:$0xff]
          %v967 = vld [vmem:[#allocation12 + $0x18] sm:$0xff]
          %v968 = vld [vmem:[#allocation12 + $0x20] sm:$0xff]
          %v969 = vld [vmem:[#allocation12 + $0x28] sm:$0xff]
          %v970 = vld [vmem:[#allocation12 + $0x30] sm:$0xff]
          %v971 = vld [vmem:[#allocation12 + $0x38] sm:$0xff]
          %v972 = vld [vmem:[#allocation12 + $0x40] sm:$0xff]
          %v973 = vld [vmem:[#allocation12 + $0x48] sm:$0xff]
          %v974 = vld [vmem:[#allocation12 + $0x50] sm:$0xff]
          %v975 = vld [vmem:[#allocation12 + $0x58] sm:$0xff]
          %v976 = vld [vmem:[#allocation12 + $0x60] sm:$0xff]
          %v977 = vld [vmem:[#allocation12 + $0x68] sm:$0xff]
          %v978 = vld [vmem:[#allocation12 + $0x70] sm:$0xff]
          %v979 = vld [vmem:[#allocation12 + $0x78] sm:$0xff]
          %v980 = vld [vmem:[%s9] sm:$0x1]
          %v982 = vlaneseq
          %v983 = vshrl.u32 %v982, 7
          %v984 = vsub.s32 0, %v983
          %v985 = vrot.slane %v980, %v984
          %987 = vmatprep.subr.mxu0 0.0
          %988 = vmatpush1.msra.mxu0 %v979
          %989 = vmatprep.subr.mxu0 0.0
          %990 = vmatpush1.msra.mxu0 %v978
          %991 = vmatprep.subr.mxu0 0.0
          %992 = vmatpush1.msra.mxu0 %v977
          %993 = vmatprep.subr.mxu0 0.0
          %994 = vmatpush1.msra.mxu0 %v976
          %995 = vmatprep.subr.mxu0 0.0
          %996 = vmatpush1.msra.mxu0 %v975
          %997 = vmatprep.subr.mxu0 0.0
          %998 = vmatpush1.msra.mxu0 %v974
          %999 = vmatprep.subr.mxu0 0.0
          %1000 = vmatpush1.msra.mxu0 %v973
          %1001 = vmatprep.subr.mxu0 0.0
          %1002 = vmatpush1.msra.mxu0 %v972
          %1003 = vmatprep.subr.mxu0 0.0
          %1004 = vmatpush1.msra.mxu0 %v971
          %1005 = vmatprep.subr.mxu0 0.0
          %1006 = vmatpush1.msra.mxu0 %v970
          %1007 = vmatprep.subr.mxu0 0.0
          %1008 = vmatpush1.msra.mxu0 %v969
          %1009 = vmatprep.subr.mxu0 0.0
          %1010 = vmatpush1.msra.mxu0 %v968
          %1011 = vmatprep.subr.mxu0 0.0
          %1012 = vmatpush1.msra.mxu0 %v967
          %1013 = vmatprep.subr.mxu0 0.0
          %1014 = vmatpush1.msra.mxu0 %v966
          %1015 = vmatprep.subr.mxu0 0.0
          %1016 = vmatpush1.msra.mxu0 %v965
          %1017 = vmatprep.subr.mxu0 0.0
          %1018 = vmatpush1.msra.mxu0 %v964
          %1019 = vmatprep.subr.mxu0 0.0
          %1020 = vmatpush2.msra.mxu0 0.0
          %1021 = vmatprep.subr.mxu0 0.0
          %1022 = vmatpush2.msra.mxu0 0.0
          %1023 = vmatprep.subr.mxu0 0.0
          %1024 = vmatpush2.msra.mxu0 0.0
          %1025 = vmatprep.subr.mxu0 0.0
          %1026 = vmatpush2.msra.mxu0 0.0
          %1027 = vmatprep.subr.mxu0 0.0
          %1028 = vmatpush2.msra.mxu0 0.0
          %1029 = vmatprep.subr.mxu0 0.0
          %1030 = vmatpush2.msra.mxu0 0.0
          %1031 = vmatprep.subr.mxu0 0.0
          %1032 = vmatpush2.msra.mxu0 0.0
          %1033 = vmatprep.subr.mxu0 0.0
          %1034 = vmatpush2.msra.mxu0 0.0
          %1035 = vmatprep.subr.mxu0 0.0
          %1036 = vmatpush2.msra.mxu0 0.0
          %1037 = vmatprep.subr.mxu0 0.0
          %1038 = vmatpush2.msra.mxu0 0.0
          %1039 = vmatprep.subr.mxu0 0.0
          %1040 = vmatpush2.msra.mxu0 0.0
          %1041 = vmatprep.subr.mxu0 0.0
          %1042 = vmatpush2.msra.mxu0 0.0
          %1043 = vmatprep.subr.mxu0 0.0
          %1044 = vmatpush2.msra.mxu0 0.0
          %1045 = vmatprep.subr.mxu0 0.0
          %1046 = vmatpush2.msra.mxu0 0.0
          %1047 = vmatprep.subr.mxu0 0.0
          %1048 = vmatpush2.msra.mxu0 0.0
          %1049 = vmatprep.subr.mxu0 0.0
          %1050 = vmatpush2.msra.mxu0 0.0
          %1051 = vmatprep.mubr.f32.mxu0 0.0
          %1052 = vmatmul.mubr.f32.gmra.mxu0 %v963
          %v1053 = vpop.f32.mrf.mxu0
          %v1054 = vadd.f32 %v985, %v1053
          %v1055 = vpop.f32.mrf.mxu0
          %1056 = vdwg.mxu0
          %1057 = vst [vmem:[%s489] sm:$0xff] %v1054
        $region92: #{tpu_custom_call.1} parent=59 // pred_fallthru
          _
        %s1058 = sand.u32 %s274, 1
        %s1059 = scalar_lea.sflag [#allocation5], %s1058
        %s1060 = sand.u32 %s274, 1
        %s1061 = smul.addr %s1060, 8
        %s1062 = scalar_lea.vmem [#allocation14], %s1061
        // Predicated region
        $region93: #{tpu_custom_call.1} parent=59 // pred_check
          %p1063 = pneg %p284
        $region94: #{tpu_custom_call.1} parent=59 // pred_check_branch
          %1065 = sbr.rel (%p1063) target = $region96
        $region95: #{tpu_custom_call.1} parent=59 // pred_region
          %s1067 = ssub.s32 128, 128
          %1068 = vsyncadd %s1059, %s1067
          %s1069 = smul.addr %s36, 128
          %s1070 = scalar_lea.hbm %s10, %s1069
          %s1072 = sshll.u32 %s1062, 4
          %s1073 = int_to_ptr.vmem [resolvable:$true] %s1072
          %1075 = dma.vmem_to_hbm [thread:$0]  %s1073, 128, %s1070, %s1059
        $region96: #{tpu_custom_call.1} parent=59 // pred_fallthru
          _
      $region60: #{tpu_custom_call.1} parent=5 // pred_fallthru
        _
      %p1076 = scmp.le.s32.totalorder 2, %s27
      // Predicated region
      $region97: #{tpu_custom_call.1} parent=5 // pred_check
        %p1077 = pneg %p1076
      $region98: #{tpu_custom_call.1} parent=5 // pred_check_branch
        %1079 = sbr.rel (%p1077) target = $region100
      $region99: #{tpu_custom_call.1} parent=5 // pred_region
        %s1080 = ssub.s32 %s27, 2
        // Predicated region
        $region101: #{tpu_custom_call.1} parent=99 // pred_check
          %p1081 = pneg %p290
        $region102: #{tpu_custom_call.1} parent=99 // pred_check_branch
          %1083 = sbr.rel (%p1081) target = $region104
        $region103: #{tpu_custom_call.1} parent=99 // pred_region
          %s1084 = sand.u32 %s275, 1
          %s1085 = scalar_lea.sflag [#allocation5], %s1084
          %s1086 = sand.u32 %s275, 1
          %s1087 = smul.addr %s1086, 8
          %s1088 = scalar_lea.vmem [#allocation14], %s1087
          %1089 = dma.done %s1085, 128
        $region104: #{tpu_custom_call.1} parent=99 // pred_fallthru
          _
      $region100: #{tpu_custom_call.1} parent=5 // pred_fallthru
        _
    $region6: #{tpu_custom_call.1} parent=1 // loop_footer
      %s31 = sadd.s32 1, %s27
    $region7: #{tpu_custom_call.1} parent=1 // loop_footer_branch
      %26 = sbr.rel target = $region3
    $region8: #{tpu_custom_call.1} parent=1 // loop_exit
      _
    %1090 = vsyncpa [#allocation4], 1
    %s1091 = scalar_lea.sflag [#allocation4], 1
    %1092 = vsyncpa %s1091, 1
    %1093 = vsyncpa [#allocation7], 1
    %s1094 = scalar_lea.sflag [#allocation7], 1
    %1095 = vsyncpa %s1094, 1
    %1096 = vsyncpa [#allocation10], 1
    %1097 = vsyncpa [#allocation13], 1
    %1098 = vsyncpa [#allocation5], 1
    %s1099 = scalar_lea.sflag [#allocation5], 1
    %1100 = vsyncpa %s1099, 1

</llo_original>
